<compile_context>
chip_gen: v5e
topology: v5e:2x2
jax: 0.10.0
libtpu: 0.0.40
codegen_flags: <defaults>
</compile_context>

<pallas_src>
import functools

import jax
import jax.numpy as jnp
from jax.experimental import pallas as pl
from jax.experimental.pallas import tpu as pltpu


def _lambda_kernel(x_ref, o_ref, *, C, Ho, Wo, pad, h_strided, flat_out):
    """Option-A shortcut body (pure data movement).

    x_ref: (nb, C*H, W)       if h_strided  (even-H rows selected in-kernel)
           (nb, C*Ho, W)      otherwise     (even-H rows selected by BlockSpec)
    o_ref: (nb, Cout*Ho*Wo)   if flat_out   (single lane-dense store)
           (nb, Cout*Ho, Wo)  otherwise     (fallback layout)
    """
    nb = x_ref.shape[0]

    if h_strided:
        # Even rows of the C*H sublane axis are exactly the even-H rows
        # (H is even by construction): one sublane-strided read selects them.
        x_h = x_ref[:, pl.ds(0, C * Ho, stride=2), :]            # (nb, C*Ho, W)
    else:
        x_h = x_ref[...]                                         # (nb, C*Ho, W)

    # W subsample: split the lane axis into (Wo, 2) and keep the even element.
    x_ds = x_h.reshape(nb, C * Ho, Wo, 2)[..., 0]                # (nb, C*Ho, Wo)
    x_ds = x_ds.astype(o_ref.dtype)

    if flat_out:
        # Sublane->lane compaction (XLU work, otherwise idle here), then fold
        # the channel zero-pads in and issue one full-block, lane-dense store.
        payload = x_ds.reshape(nb, C * Ho * Wo)
        if pad > 0:
            z = jnp.zeros((nb, pad * Ho * Wo), dtype=o_ref.dtype)
            payload = jnp.concatenate([z, payload, z], axis=-1)  # (nb, Cout*Ho*Wo)
        o_ref[...] = payload
    else:
        # Fallback layout (previously validated): three range stores.
        if pad > 0:
            z = jnp.zeros((nb, pad * Ho, Wo), dtype=o_ref.dtype)
            o_ref[:, 0:pad * Ho, :] = z                              # leading pad
            o_ref[:, (pad + C) * Ho:(2 * pad + C) * Ho, :] = z       # trailing pad
        o_ref[:, pad * Ho:(pad + C) * Ho, :] = x_ds


def _device_min_grid():
    """v7x has 2 TensorCores sharing the grid -> prefer >= 4 grid steps there."""
    try:
        kind = jax.devices()[0].device_kind.lower()
    except Exception:
        return 1
    return 4 if ("v7" in kind or "tpu7" in kind) else 1


def _sublane_multiple(dtype):
    # Native sublane tile is 8 rows of 32-bit; sub-32-bit dtypes pack 2x/4x.
    return 8 * max(1, 4 // jnp.dtype(dtype).itemsize)


def _pick_batch_block(N, bytes_per_batch, target_bytes, min_grid, row_mult):
    """Batch elements per grid step.

    Returns N (full extent) or a multiple of `row_mult`, so the flat
    (nb, Cout*Ho*Wo) output block satisfies the sublane-tiling rules.
    """
    nb = max(1, min(N, int(target_bytes // max(1, bytes_per_batch))))
    if min_grid > 1:
        nb = min(nb, max(1, N // min_grid))
    if nb >= N:
        return N
    if nb >= row_mult:
        return (nb // row_mult) * row_mult
    # TODO(synk): no channel/spatial tiling fallback — a single batch element
    # larger than the VMEM budget will still fail to compile (fine for CIFAR).
    return min(N, row_mult)


@functools.lru_cache(maxsize=None)
def _build_call(*, N, C, H, W, dtype, pad, nb, h_presub, flat_out,
                vmem_limit_bytes):
    Ho, Wo = H // 2, W // 2
    Cout = C + 2 * pad
    itemsize = jnp.dtype(dtype).itemsize

    if h_presub:
        # Input presented as (N, C*Ho, 2W); the block grabs only the first W
        # lanes of each row == the even-H rows (legal since W % 128 == 0).
        in_block = (nb, C * Ho, W)
    else:
        in_block = (nb, C * H, W)

    if flat_out:
        out_shape = (N, Cout * Ho * Wo)
        out_spec = pl.BlockSpec((nb, Cout * Ho * Wo), lambda n: (n, 0))
    else:
        out_shape = (N, Cout * Ho, Wo)
        out_spec = pl.BlockSpec((nb, Cout * Ho, Wo), lambda n: (n, 0, 0))

    kernel = functools.partial(_lambda_kernel, C=C, Ho=Ho, Wo=Wo, pad=pad,
                               h_strided=not h_presub, flat_out=flat_out)

    # Pure copy: tell XLA there is no compute, only HBM traffic.
    bytes_accessed = (in_block[1] * in_block[2] + Cout * Ho * Wo) * N * itemsize

    call = pl.pallas_call(
        kernel,
        out_shape=jax.ShapeDtypeStruct(out_shape, dtype),
        grid_spec=pltpu.PrefetchScalarGridSpec(
            num_scalar_prefetch=0,
            grid=(pl.cdiv(N, nb),),
            in_specs=[pl.BlockSpec(in_block, lambda n: (n, 0, 0))],
            out_specs=out_spec,
        ),
        compiler_params=pltpu.CompilerParams(
            dimension_semantics=("parallel",),
            vmem_limit_bytes=vmem_limit_bytes,
        ),
        cost_estimate=pl.CostEstimate(flops=0, transcendentals=0,
                                      bytes_accessed=bytes_accessed),
    )
    return jax.jit(call)


_FLAT_PROBE_CACHE = {}


def _flat_out_supported(**kw):
    """Probe-compile the lane-dense variant once per configuration."""
    key = tuple(sorted((k, str(v)) for k, v in kw.items()))
    cached = _FLAT_PROBE_CACHE.get(key)
    if cached is not None:
        return cached
    N, C, H, W = kw["N"], kw["C"], kw["H"], kw["W"]
    Ho = H // 2
    in_shape = (N, C * Ho, 2 * W) if kw["h_presub"] else (N, C * H, W)
    try:
        fn = _build_call(flat_out=True, **kw)
        fn.lower(jax.ShapeDtypeStruct(in_shape, kw["dtype"])).compile()
        ok = True
    except Exception:
        ok = False
    _FLAT_PROBE_CACHE[key] = ok
    return ok


def lambda_layer(x, planes, *, target_block_bytes=8 * 1024 * 1024,
                 vmem_limit_bytes=40 * 1024 * 1024):
    """Pallas implementation of the option-A shortcut lambda (NCHW input)."""
    N, C, H, W = x.shape
    pad = planes // 4
    dtype = jnp.dtype(x.dtype)

    # x[:, :, ::2, ::2] keeps ceil(H/2) x ceil(W/2); for odd H/W append one
    # trailing row/col (it lands on an odd index so it is never selected) to
    # keep the even-row / even-lane tricks aligned.
    if (H % 2) or (W % 2):
        x = jnp.pad(x, ((0, 0), (0, 0), (0, H % 2), (0, W % 2)))
        H, W = H + H % 2, W + W % 2

    Ho, Wo = H // 2, W // 2
    Cout = C + 2 * pad

    # Wide rows: fetch only the even-H rows via the BlockSpec (halves input
    # HBM bytes). Needs the non-full last block dim (W) to be 128-aligned.
    h_presub = (W % 128 == 0)
    if h_presub:
        x_in = x.reshape(N, C * Ho, 2 * W)   # free row-major reshape
        in_rows = C * Ho
    else:
        x_in = x.reshape(N, C * H, W)        # free row-major reshape
        in_rows = C * H

    bytes_per_batch = (in_rows * W + Cout * Ho * Wo) * dtype.itemsize
    nb = _pick_batch_block(N, bytes_per_batch, target_block_bytes,
                           _device_min_grid(), _sublane_multiple(dtype))

    kw = dict(N=N, C=C, H=H, W=W, dtype=dtype, pad=pad, nb=nb,
              h_presub=h_presub, vmem_limit_bytes=vmem_limit_bytes)
    flat_out = _flat_out_supported(**kw)
    fn = _build_call(flat_out=flat_out, **kw)

    out = fn(x_in)
    return out.reshape(N, Cout, Ho, Wo)


def lambda_layer_ref(x, planes):
    """Pure-JAX reference mirroring the PyTorch lambda exactly."""
    pad = planes // 4
    xs = x[:, :, ::2, ::2]
    return jnp.pad(xs, ((0, 0), (pad, pad), (0, 0), (0, 0)),
                   mode="constant", constant_values=0)


if __name__ == "__main__":
    key = jax.random.PRNGKey(0)
    k1, k2 = jax.random.split(key)

    # Small test shape (consistent with the module's use).
    N, C, H, W = 2, 4, 16, 16
    planes = 8  # -> channel pad of planes // 4 = 2 on each side
    x = jax.random.normal(k1, (N, C, H, W), dtype=jnp.float32)

    out = jax.block_until_ready(lambda_layer(x, planes))
    ref = lambda_layer_ref(x, planes)
    assert out.shape == ref.shape, (out.shape, ref.shape)
    assert jnp.array_equal(out, ref), "mismatch vs reference (small case)"

    # ResNet-CIFAR-like downsampling stage.
    x2 = jax.random.normal(k2, (4, 16, 32, 32), dtype=jnp.float32)
    out2 = jax.block_until_ready(lambda_layer(x2, 32))
    ref2 = lambda_layer_ref(x2, 32)
    assert out2.shape == ref2.shape, (out2.shape, ref2.shape)
    assert jnp.array_equal(out2, ref2), "mismatch vs reference (stage case)"

    print("KERNEL_OK")
</pallas_src>

<mosaic_0001>
module attributes {stable_mosaic.version = 11 : i64} {
  func.func @_lambda_kernel(%arg0: i32, %arg1: memref<2x64x16xf32, #tpu.memory_space<vmem>>, %arg2: memref<2x64x8xf32, #tpu.memory_space<vmem>>) attributes {dimension_semantics = [#tpu.dimension_semantics<parallel>], iteration_bounds = array<i64: 1>, scalar_prefetch = 0 : i64, scratch_operands = 0 : i64, tpu.core_type = #tpu.core_type<tc>, window_params = [{transform_indices = @transform_0, window_bounds = array<i64: 2, 64, 16>}, {transform_indices = @transform_1, window_bounds = array<i64: 2, 64, 8>}]} {
    %c0 = arith.constant 0 : index
    %c0_0 = arith.constant 0 : index
    %c0_1 = arith.constant 0 : index
    %0 = tpu.strided_load %arg1[%c0, %c0_0, %c0_1] {strides = array<i32: 1, 2, 1>} : memref<2x64x16xf32, #tpu.memory_space<vmem>>, vector<2x32x16xf32>
    %1 = vector.shape_cast %0 : vector<2x32x16xf32> to vector<2x32x8x2xf32>
    %2 = vector.extract_strided_slice %1 {offsets = [0, 0, 0, 0], sizes = [2, 32, 8, 1], strides = [1, 1, 1, 1]} : vector<2x32x8x2xf32> to vector<2x32x8x1xf32>
    %3 = vector.shape_cast %2 : vector<2x32x8x1xf32> to vector<2x32x8xf32>
    %cst = arith.constant 0.000000e+00 : f32
    %4 = vector.broadcast %cst : f32 to vector<2x16x8xf32>
    %c0_2 = arith.constant 0 : index
    %c0_3 = arith.constant 0 : index
    %c0_4 = arith.constant 0 : index
    %5 = vector.load %arg2[%c0_2, %c0_3, %c0_4] : memref<2x64x8xf32, #tpu.memory_space<vmem>>, vector<2x16x8xf32>
    tpu.vector_store %arg2[%c0_2, %c0_3, %c0_4], %4 {strides = array<i32>} : memref<2x64x8xf32, #tpu.memory_space<vmem>>, vector<2x16x8xf32>,
    %c0_5 = arith.constant 0 : index
    %c48 = arith.constant 48 : index
    %c0_6 = arith.constant 0 : index
    %6 = vector.load %arg2[%c0_5, %c48, %c0_6] : memref<2x64x8xf32, #tpu.memory_space<vmem>>, vector<2x16x8xf32>
    tpu.vector_store %arg2[%c0_5, %c48, %c0_6], %4 {strides = array<i32>} : memref<2x64x8xf32, #tpu.memory_space<vmem>>, vector<2x16x8xf32>,
    %c0_7 = arith.constant 0 : index
    %c16 = arith.constant 16 : index
    %c0_8 = arith.constant 0 : index
    %7 = vector.load %arg2[%c0_7, %c16, %c0_8] : memref<2x64x8xf32, #tpu.memory_space<vmem>>, vector<2x32x8xf32>
    tpu.vector_store %arg2[%c0_7, %c16, %c0_8], %3 {strides = array<i32>} : memref<2x64x8xf32, #tpu.memory_space<vmem>>, vector<2x32x8xf32>,
    return
  }
  func.func @transform_0(%arg0: i32) -> (i32, i32, i32) {
    %c0_i32 = arith.constant 0 : i32
    %c0_i32_0 = arith.constant 0 : i32
    %c0_i32_1 = arith.constant 0 : i32
    return %arg0, %c0_i32, %c0_i32_0 : i32, i32, i32
  }
  func.func @transform_1(%arg0: i32) -> (i32, i32, i32) {
    %c0_i32 = arith.constant 0 : i32
    %c0_i32_0 = arith.constant 0 : i32
    %c0_i32_1 = arith.constant 0 : i32
    return %arg0, %c0_i32, %c0_i32_0 : i32, i32, i32
  }
}

</mosaic_0001>

<llo_original>
// kernel: tpu_custom_call.1
$region0: #{tpu_custom_call.1}
  #allocation0 [shape = 'u32[]', space=smem, size = 0x4, offset = 0x4, fixed_abs, tag = 'smem constant byte address 0x4 - core index']
  #allocation1 [shape = 'u32[72,128]{1,0:T(1,128)}', space=vmem, size = 0x9000, scoped, tag = 'internal scratch']
  %s0 = inlined_call_operand.vmem [shape: f32[2,64,16], index: 0, kind: input, shape index: {}]
  %s1 = inlined_call_operand.vmem [shape: f32[2,64,8], index: 1, kind: output, shape index: {}]
  %s2 = sld [smem:[#allocation0]]
  $region14: #{tpu_custom_call.1} parent=0
    _
  %s4 = ssub.s32 1, %s2
  %s5 = scalar_select 0, %s4, %s2
  // Predicated region
  $region2: #{tpu_custom_call.1} parent=0 // pred_check
    _
  $region3: #{tpu_custom_call.1} parent=0 // pred_check_branch
    %7 = sbr.rel (0) target = $region5
  $region4: #{tpu_custom_call.1} parent=0 // pred_region
    _
  $region5: #{tpu_custom_call.1} parent=0 // pred_fallthru
    _
  %v8 = vld [vmem:[%s0] ss:$2 sm:$0xff]
  %s9 = scalar_lea.vmem %s0, 16
  %v10 = vld [vmem:[%s9] ss:$2 sm:$0xff]
  %s11 = scalar_lea.vmem %s0, 32
  %v12 = vld [vmem:[%s11] ss:$2 sm:$0xff]
  %s13 = scalar_lea.vmem %s0, 48
  %v14 = vld [vmem:[%s13] ss:$2 sm:$0xff]
  %s15 = scalar_lea.vmem %s0, 64
  %v16 = vld [vmem:[%s15] ss:$2 sm:$0xff]
  %s17 = scalar_lea.vmem %s0, 80
  %v18 = vld [vmem:[%s17] ss:$2 sm:$0xff]
  %s19 = scalar_lea.vmem %s0, 96
  %v20 = vld [vmem:[%s19] ss:$2 sm:$0xff]
  %s21 = scalar_lea.vmem %s0, 112
  %v22 = vld [vmem:[%s21] ss:$2 sm:$0xff]
  %31 = vrot.lane.b32.xlu0 %v8, 126
  %v32 = vpop.permute.xlu0 %31
  %33 = vrot.lane.b32.xlu0 %v10, 126
  %v34 = vpop.permute.xlu0 %33
  %35 = vrot.lane.b32.xlu0 %v12, 126
  %v36 = vpop.permute.xlu0 %35
  %37 = vrot.lane.b32.xlu0 %v14, 126
  %v38 = vpop.permute.xlu0 %37
  %39 = vrot.lane.b32.xlu0 %v16, 126
  %v40 = vpop.permute.xlu0 %39
  %41 = vrot.lane.b32.xlu0 %v18, 126
  %v42 = vpop.permute.xlu0 %41
  %43 = vrot.lane.b32.xlu0 %v20, 126
  %v44 = vpop.permute.xlu0 %43
  %45 = vrot.lane.b32.xlu0 %v22, 126
  %v46 = vpop.permute.xlu0 %45
  %55 = vrot.lane.b32.xlu0 %v8, 124
  %v56 = vpop.permute.xlu0 %55
  %57 = vrot.lane.b32.xlu0 %v10, 124
  %v58 = vpop.permute.xlu0 %57
  %59 = vrot.lane.b32.xlu0 %v12, 124
  %v60 = vpop.permute.xlu0 %59
  %61 = vrot.lane.b32.xlu0 %v14, 124
  %v62 = vpop.permute.xlu0 %61
  %63 = vrot.lane.b32.xlu0 %v16, 124
  %v64 = vpop.permute.xlu0 %63
  %65 = vrot.lane.b32.xlu0 %v18, 124
  %v66 = vpop.permute.xlu0 %65
  %67 = vrot.lane.b32.xlu0 %v20, 124
  %v68 = vpop.permute.xlu0 %67
  %69 = vrot.lane.b32.xlu0 %v22, 124
  %v70 = vpop.permute.xlu0 %69
  %79 = vrot.lane.b32.xlu0 %v8, 122
  %v80 = vpop.permute.xlu0 %79
  %81 = vrot.lane.b32.xlu0 %v10, 122
  %v82 = vpop.permute.xlu0 %81
  %83 = vrot.lane.b32.xlu0 %v12, 122
  %v84 = vpop.permute.xlu0 %83
  %85 = vrot.lane.b32.xlu0 %v14, 122
  %v86 = vpop.permute.xlu0 %85
  %87 = vrot.lane.b32.xlu0 %v16, 122
  %v88 = vpop.permute.xlu0 %87
  %89 = vrot.lane.b32.xlu0 %v18, 122
  %v90 = vpop.permute.xlu0 %89
  %91 = vrot.lane.b32.xlu0 %v20, 122
  %v92 = vpop.permute.xlu0 %91
  %93 = vrot.lane.b32.xlu0 %v22, 122
  %v94 = vpop.permute.xlu0 %93
  %103 = vrot.lane.b32.xlu0 %v8, 120
  %v104 = vpop.permute.xlu0 %103
  %105 = vrot.lane.b32.xlu0 %v10, 120
  %v106 = vpop.permute.xlu0 %105
  %107 = vrot.lane.b32.xlu0 %v12, 120
  %v108 = vpop.permute.xlu0 %107
  %109 = vrot.lane.b32.xlu0 %v14, 120
  %v110 = vpop.permute.xlu0 %109
  %111 = vrot.lane.b32.xlu0 %v16, 120
  %v112 = vpop.permute.xlu0 %111
  %113 = vrot.lane.b32.xlu0 %v18, 120
  %v114 = vpop.permute.xlu0 %113
  %115 = vrot.lane.b32.xlu0 %v20, 120
  %v116 = vpop.permute.xlu0 %115
  %117 = vrot.lane.b32.xlu0 %v22, 120
  %v118 = vpop.permute.xlu0 %117
  %127 = vrot.lane.b32.xlu0 %v8, 118
  %v128 = vpop.permute.xlu0 %127
  %129 = vrot.lane.b32.xlu0 %v10, 118
  %v130 = vpop.permute.xlu0 %129
  %131 = vrot.lane.b32.xlu0 %v12, 118
  %v132 = vpop.permute.xlu0 %131
  %133 = vrot.lane.b32.xlu0 %v14, 118
  %v134 = vpop.permute.xlu0 %133
  %135 = vrot.lane.b32.xlu0 %v16, 118
  %v136 = vpop.permute.xlu0 %135
  %137 = vrot.lane.b32.xlu0 %v18, 118
  %v138 = vpop.permute.xlu0 %137
  %139 = vrot.lane.b32.xlu0 %v20, 118
  %v140 = vpop.permute.xlu0 %139
  %141 = vrot.lane.b32.xlu0 %v22, 118
  %v142 = vpop.permute.xlu0 %141
  %151 = vrot.lane.b32.xlu0 %v8, 116
  %v152 = vpop.permute.xlu0 %151
  %153 = vrot.lane.b32.xlu0 %v10, 116
  %v154 = vpop.permute.xlu0 %153
  %155 = vrot.lane.b32.xlu0 %v12, 116
  %v156 = vpop.permute.xlu0 %155
  %157 = vrot.lane.b32.xlu0 %v14, 116
  %v158 = vpop.permute.xlu0 %157
  %159 = vrot.lane.b32.xlu0 %v16, 116
  %v160 = vpop.permute.xlu0 %159
  %161 = vrot.lane.b32.xlu0 %v18, 116
  %v162 = vpop.permute.xlu0 %161
  %163 = vrot.lane.b32.xlu0 %v20, 116
  %v164 = vpop.permute.xlu0 %163
  %165 = vrot.lane.b32.xlu0 %v22, 116
  %v166 = vpop.permute.xlu0 %165
  %175 = vrot.lane.b32.xlu0 %v8, 114
  %v176 = vpop.permute.xlu0 %175
  %177 = vrot.lane.b32.xlu0 %v10, 114
  %v178 = vpop.permute.xlu0 %177
  %179 = vrot.lane.b32.xlu0 %v12, 114
  %v180 = vpop.permute.xlu0 %179
  %181 = vrot.lane.b32.xlu0 %v14, 114
  %v182 = vpop.permute.xlu0 %181
  %183 = vrot.lane.b32.xlu0 %v16, 114
  %v184 = vpop.permute.xlu0 %183
  %185 = vrot.lane.b32.xlu0 %v18, 114
  %v186 = vpop.permute.xlu0 %185
  %187 = vrot.lane.b32.xlu0 %v20, 114
  %v188 = vpop.permute.xlu0 %187
  %189 = vrot.lane.b32.xlu0 %v22, 114
  %v190 = vpop.permute.xlu0 %189
  %v199 = vrot.slane %v56, 4
  %vm200 = vcmask 1047556
  %v201 = vsel %vm200, %v199, %v8
  %v202 = vrot.slane %v8, 4
  %v203 = vsel %vm200, %v56, %v202
  %v205 = vunpack.c.l.s4 1983009808
  %v206 = vunpack.c.0.s8 %v205
  %v207 = vperm.slane %v201, %v206
  %v209 = vunpack.c.l.s4 1983009808
  %v210 = vunpack.c.0.s8 %v209
  %v211 = vperm.slane %v203, %v210
  %v212 = vrot.slane %v80, 4
  %v213 = vsel %vm200, %v212, %v32
  %v214 = vrot.slane %v32, 4
  %v215 = vsel %vm200, %v80, %v214
  %v217 = vunpack.c.l.s4 1983009808
  %v218 = vunpack.c.0.s8 %v217
  %v219 = vperm.slane %v213, %v218
  %v221 = vunpack.c.l.s4 1983009808
  %v222 = vunpack.c.0.s8 %v221
  %v223 = vperm.slane %v215, %v222
  %v224 = vrot.slane %v152, 4
  %v225 = vsel %vm200, %v224, %v104
  %v226 = vrot.slane %v104, 4
  %v227 = vsel %vm200, %v152, %v226
  %v229 = vunpack.c.l.s4 1983009808
  %v230 = vunpack.c.0.s8 %v229
  %v231 = vperm.slane %v225, %v230
  %v233 = vunpack.c.l.s4 1983009808
  %v234 = vunpack.c.0.s8 %v233
  %v235 = vperm.slane %v227, %v234
  %v236 = vrot.slane %v176, 4
  %v237 = vsel %vm200, %v236, %v128
  %v238 = vrot.slane %v128, 4
  %v239 = vsel %vm200, %v176, %v238
  %v241 = vunpack.c.l.s4 1983009808
  %v242 = vunpack.c.0.s8 %v241
  %v243 = vperm.slane %v237, %v242
  %v245 = vunpack.c.l.s4 1983009808
  %v246 = vunpack.c.0.s8 %v245
  %v247 = vperm.slane %v239, %v246
  %v248 = vrot.slane %v219, 4
  %v249 = vsel %vm200, %v248, %v207
  %v250 = vrot.slane %v207, 4
  %v251 = vsel %vm200, %v219, %v250
  %v253 = vunpack.c.l.s4 1934713408
  %v254 = vunpack.c.0.s8 %v253
  %v255 = vperm.slane %v249, %v254
  %v257 = vunpack.c.l.s4 1934713408
  %v258 = vunpack.c.0.s8 %v257
  %v259 = vperm.slane %v251, %v258
  %v260 = vrot.slane %v223, 4
  %v261 = vsel %vm200, %v260, %v211
  %v262 = vrot.slane %v211, 4
  %v263 = vsel %vm200, %v223, %v262
  %v265 = vunpack.c.l.s4 1934713408
  %v266 = vunpack.c.0.s8 %v265
  %v267 = vperm.slane %v261, %v266
  %v269 = vunpack.c.l.s4 1934713408
  %v270 = vunpack.c.0.s8 %v269
  %v271 = vperm.slane %v263, %v270
  %v272 = vrot.slane %v243, 4
  %v273 = vsel %vm200, %v272, %v231
  %v274 = vrot.slane %v231, 4
  %v275 = vsel %vm200, %v243, %v274
  %v277 = vunpack.c.l.s4 1934713408
  %v278 = vunpack.c.0.s8 %v277
  %v279 = vperm.slane %v273, %v278
  %v281 = vunpack.c.l.s4 1934713408
  %v282 = vunpack.c.0.s8 %v281
  %v283 = vperm.slane %v275, %v282
  %v284 = vrot.slane %v247, 4
  %v285 = vsel %vm200, %v284, %v235
  %v286 = vrot.slane %v235, 4
  %v287 = vsel %vm200, %v247, %v286
  %v289 = vunpack.c.l.s4 1934713408
  %v290 = vunpack.c.0.s8 %v289
  %v291 = vperm.slane %v285, %v290
  %v293 = vunpack.c.l.s4 1934713408
  %v294 = vunpack.c.0.s8 %v293
  %v295 = vperm.slane %v287, %v294
  %v296 = vrot.slane %v279, 4
  %v297 = vsel %vm200, %v296, %v255
  %v298 = vrot.slane %v255, 4
  %v299 = vsel %vm200, %v279, %v298
  %v300 = vrot.slane %v283, 4
  %v301 = vsel %vm200, %v300, %v259
  %v302 = vrot.slane %v259, 4
  %v303 = vsel %vm200, %v283, %v302
  %v304 = vrot.slane %v291, 4
  %v305 = vsel %vm200, %v304, %v267
  %v306 = vrot.slane %v267, 4
  %v307 = vsel %vm200, %v291, %v306
  %v308 = vrot.slane %v295, 4
  %v309 = vsel %vm200, %v308, %v271
  %v310 = vrot.slane %v271, 4
  %v311 = vsel %vm200, %v295, %v310
  %v312 = vrot.slane %v58, 4
  %v313 = vsel %vm200, %v312, %v10
  %v314 = vrot.slane %v10, 4
  %v315 = vsel %vm200, %v58, %v314
  %v317 = vunpack.c.l.s4 1983009808
  %v318 = vunpack.c.0.s8 %v317
  %v319 = vperm.slane %v313, %v318
  %v321 = vunpack.c.l.s4 1983009808
  %v322 = vunpack.c.0.s8 %v321
  %v323 = vperm.slane %v315, %v322
  %v324 = vrot.slane %v82, 4
  %v325 = vsel %vm200, %v324, %v34
  %v326 = vrot.slane %v34, 4
  %v327 = vsel %vm200, %v82, %v326
  %v329 = vunpack.c.l.s4 1983009808
  %v330 = vunpack.c.0.s8 %v329
  %v331 = vperm.slane %v325, %v330
  %v333 = vunpack.c.l.s4 1983009808
  %v334 = vunpack.c.0.s8 %v333
  %v335 = vperm.slane %v327, %v334
  %v336 = vrot.slane %v154, 4
  %v337 = vsel %vm200, %v336, %v106
  %v338 = vrot.slane %v106, 4
  %v339 = vsel %vm200, %v154, %v338
  %v341 = vunpack.c.l.s4 1983009808
  %v342 = vunpack.c.0.s8 %v341
  %v343 = vperm.slane %v337, %v342
  %v345 = vunpack.c.l.s4 1983009808
  %v346 = vunpack.c.0.s8 %v345
  %v347 = vperm.slane %v339, %v346
  %v348 = vrot.slane %v178, 4
  %v349 = vsel %vm200, %v348, %v130
  %v350 = vrot.slane %v130, 4
  %v351 = vsel %vm200, %v178, %v350
  %v353 = vunpack.c.l.s4 1983009808
  %v354 = vunpack.c.0.s8 %v353
  %v355 = vperm.slane %v349, %v354
  %v357 = vunpack.c.l.s4 1983009808
  %v358 = vunpack.c.0.s8 %v357
  %v359 = vperm.slane %v351, %v358
  %v360 = vrot.slane %v331, 4
  %v361 = vsel %vm200, %v360, %v319
  %v362 = vrot.slane %v319, 4
  %v363 = vsel %vm200, %v331, %v362
  %v365 = vunpack.c.l.s4 1934713408
  %v366 = vunpack.c.0.s8 %v365
  %v367 = vperm.slane %v361, %v366
  %v369 = vunpack.c.l.s4 1934713408
  %v370 = vunpack.c.0.s8 %v369
  %v371 = vperm.slane %v363, %v370
  %v372 = vrot.slane %v335, 4
  %v373 = vsel %vm200, %v372, %v323
  %v374 = vrot.slane %v323, 4
  %v375 = vsel %vm200, %v335, %v374
  %v377 = vunpack.c.l.s4 1934713408
  %v378 = vunpack.c.0.s8 %v377
  %v379 = vperm.slane %v373, %v378
  %v381 = vunpack.c.l.s4 1934713408
  %v382 = vunpack.c.0.s8 %v381
  %v383 = vperm.slane %v375, %v382
  %v384 = vrot.slane %v355, 4
  %v385 = vsel %vm200, %v384, %v343
  %v386 = vrot.slane %v343, 4
  %v387 = vsel %vm200, %v355, %v386
  %v389 = vunpack.c.l.s4 1934713408
  %v390 = vunpack.c.0.s8 %v389
  %v391 = vperm.slane %v385, %v390
  %v393 = vunpack.c.l.s4 1934713408
  %v394 = vunpack.c.0.s8 %v393
  %v395 = vperm.slane %v387, %v394
  %v396 = vrot.slane %v359, 4
  %v397 = vsel %vm200, %v396, %v347
  %v398 = vrot.slane %v347, 4
  %v399 = vsel %vm200, %v359, %v398
  %v401 = vunpack.c.l.s4 1934713408
  %v402 = vunpack.c.0.s8 %v401
  %v403 = vperm.slane %v397, %v402
  %v405 = vunpack.c.l.s4 1934713408
  %v406 = vunpack.c.0.s8 %v405
  %v407 = vperm.slane %v399, %v406
  %v408 = vrot.slane %v391, 4
  %v409 = vsel %vm200, %v408, %v367
  %v410 = vrot.slane %v367, 4
  %v411 = vsel %vm200, %v391, %v410
  %v412 = vrot.slane %v395, 4
  %v413 = vsel %vm200, %v412, %v371
  %v414 = vrot.slane %v371, 4
  %v415 = vsel %vm200, %v395, %v414
  %v416 = vrot.slane %v403, 4
  %v417 = vsel %vm200, %v416, %v379
  %v418 = vrot.slane %v379, 4
  %v419 = vsel %vm200, %v403, %v418
  %v420 = vrot.slane %v407, 4
  %v421 = vsel %vm200, %v420, %v383
  %v422 = vrot.slane %v383, 4
  %v423 = vsel %vm200, %v407, %v422
  %v424 = vrot.slane %v60, 4
  %v425 = vsel %vm200, %v424, %v12
  %v426 = vrot.slane %v12, 4
  %v427 = vsel %vm200, %v60, %v426
  %v429 = vunpack.c.l.s4 1983009808
  %v430 = vunpack.c.0.s8 %v429
  %v431 = vperm.slane %v425, %v430
  %v433 = vunpack.c.l.s4 1983009808
  %v434 = vunpack.c.0.s8 %v433
  %v435 = vperm.slane %v427, %v434
  %v436 = vrot.slane %v84, 4
  %v437 = vsel %vm200, %v436, %v36
  %v438 = vrot.slane %v36, 4
  %v439 = vsel %vm200, %v84, %v438
  %v441 = vunpack.c.l.s4 1983009808
  %v442 = vunpack.c.0.s8 %v441
  %v443 = vperm.slane %v437, %v442
  %v445 = vunpack.c.l.s4 1983009808
  %v446 = vunpack.c.0.s8 %v445
  %v447 = vperm.slane %v439, %v446
  %v448 = vrot.slane %v156, 4
  %v449 = vsel %vm200, %v448, %v108
  %v450 = vrot.slane %v108, 4
  %v451 = vsel %vm200, %v156, %v450
  %v453 = vunpack.c.l.s4 1983009808
  %v454 = vunpack.c.0.s8 %v453
  %v455 = vperm.slane %v449, %v454
  %v457 = vunpack.c.l.s4 1983009808
  %v458 = vunpack.c.0.s8 %v457
  %v459 = vperm.slane %v451, %v458
  %v460 = vrot.slane %v180, 4
  %v461 = vsel %vm200, %v460, %v132
  %v462 = vrot.slane %v132, 4
  %v463 = vsel %vm200, %v180, %v462
  %v465 = vunpack.c.l.s4 1983009808
  %v466 = vunpack.c.0.s8 %v465
  %v467 = vperm.slane %v461, %v466
  %v469 = vunpack.c.l.s4 1983009808
  %v470 = vunpack.c.0.s8 %v469
  %v471 = vperm.slane %v463, %v470
  %v472 = vrot.slane %v443, 4
  %v473 = vsel %vm200, %v472, %v431
  %v474 = vrot.slane %v431, 4
  %v475 = vsel %vm200, %v443, %v474
  %v477 = vunpack.c.l.s4 1934713408
  %v478 = vunpack.c.0.s8 %v477
  %v479 = vperm.slane %v473, %v478
  %v481 = vunpack.c.l.s4 1934713408
  %v482 = vunpack.c.0.s8 %v481
  %v483 = vperm.slane %v475, %v482
  %v484 = vrot.slane %v447, 4
  %v485 = vsel %vm200, %v484, %v435
  %v486 = vrot.slane %v435, 4
  %v487 = vsel %vm200, %v447, %v486
  %v489 = vunpack.c.l.s4 1934713408
  %v490 = vunpack.c.0.s8 %v489
  %v491 = vperm.slane %v485, %v490
  %v493 = vunpack.c.l.s4 1934713408
  %v494 = vunpack.c.0.s8 %v493
  %v495 = vperm.slane %v487, %v494
  %v496 = vrot.slane %v467, 4
  %v497 = vsel %vm200, %v496, %v455
  %v498 = vrot.slane %v455, 4
  %v499 = vsel %vm200, %v467, %v498
  %v501 = vunpack.c.l.s4 1934713408
  %v502 = vunpack.c.0.s8 %v501
  %v503 = vperm.slane %v497, %v502
  %v505 = vunpack.c.l.s4 1934713408
  %v506 = vunpack.c.0.s8 %v505
  %v507 = vperm.slane %v499, %v506
  %v508 = vrot.slane %v471, 4
  %v509 = vsel %vm200, %v508, %v459
  %v510 = vrot.slane %v459, 4
  %v511 = vsel %vm200, %v471, %v510
  %v513 = vunpack.c.l.s4 1934713408
  %v514 = vunpack.c.0.s8 %v513
  %v515 = vperm.slane %v509, %v514
  %v517 = vunpack.c.l.s4 1934713408
  %v518 = vunpack.c.0.s8 %v517
  %v519 = vperm.slane %v511, %v518
  %v520 = vrot.slane %v503, 4
  %v521 = vsel %vm200, %v520, %v479
  %v522 = vrot.slane %v479, 4
  %v523 = vsel %vm200, %v503, %v522
  %v524 = vrot.slane %v507, 4
  %v525 = vsel %vm200, %v524, %v483
  %v526 = vrot.slane %v483, 4
  %v527 = vsel %vm200, %v507, %v526
  %v528 = vrot.slane %v515, 4
  %v529 = vsel %vm200, %v528, %v491
  %v530 = vrot.slane %v491, 4
  %v531 = vsel %vm200, %v515, %v530
  %v532 = vrot.slane %v519, 4
  %v533 = vsel %vm200, %v532, %v495
  %v534 = vrot.slane %v495, 4
  %v535 = vsel %vm200, %v519, %v534
  %v536 = vrot.slane %v62, 4
  %v537 = vsel %vm200, %v536, %v14
  %v538 = vrot.slane %v14, 4
  %v539 = vsel %vm200, %v62, %v538
  %v541 = vunpack.c.l.s4 1983009808
  %v542 = vunpack.c.0.s8 %v541
  %v543 = vperm.slane %v537, %v542
  %v545 = vunpack.c.l.s4 1983009808
  %v546 = vunpack.c.0.s8 %v545
  %v547 = vperm.slane %v539, %v546
  %v548 = vrot.slane %v86, 4
  %v549 = vsel %vm200, %v548, %v38
  %v550 = vrot.slane %v38, 4
  %v551 = vsel %vm200, %v86, %v550
  %v553 = vunpack.c.l.s4 1983009808
  %v554 = vunpack.c.0.s8 %v553
  %v555 = vperm.slane %v549, %v554
  %v557 = vunpack.c.l.s4 1983009808
  %v558 = vunpack.c.0.s8 %v557
  %v559 = vperm.slane %v551, %v558
  %v560 = vrot.slane %v158, 4
  %v561 = vsel %vm200, %v560, %v110
  %v562 = vrot.slane %v110, 4
  %v563 = vsel %vm200, %v158, %v562
  %v565 = vunpack.c.l.s4 1983009808
  %v566 = vunpack.c.0.s8 %v565
  %v567 = vperm.slane %v561, %v566
  %v569 = vunpack.c.l.s4 1983009808
  %v570 = vunpack.c.0.s8 %v569
  %v571 = vperm.slane %v563, %v570
  %v572 = vrot.slane %v182, 4
  %v573 = vsel %vm200, %v572, %v134
  %v574 = vrot.slane %v134, 4
  %v575 = vsel %vm200, %v182, %v574
  %v577 = vunpack.c.l.s4 1983009808
  %v578 = vunpack.c.0.s8 %v577
  %v579 = vperm.slane %v573, %v578
  %v581 = vunpack.c.l.s4 1983009808
  %v582 = vunpack.c.0.s8 %v581
  %v583 = vperm.slane %v575, %v582
  %v584 = vrot.slane %v555, 4
  %v585 = vsel %vm200, %v584, %v543
  %v586 = vrot.slane %v543, 4
  %v587 = vsel %vm200, %v555, %v586
  %v589 = vunpack.c.l.s4 1934713408
  %v590 = vunpack.c.0.s8 %v589
  %v591 = vperm.slane %v585, %v590
  %v593 = vunpack.c.l.s4 1934713408
  %v594 = vunpack.c.0.s8 %v593
  %v595 = vperm.slane %v587, %v594
  %v596 = vrot.slane %v559, 4
  %v597 = vsel %vm200, %v596, %v547
  %v598 = vrot.slane %v547, 4
  %v599 = vsel %vm200, %v559, %v598
  %v601 = vunpack.c.l.s4 1934713408
  %v602 = vunpack.c.0.s8 %v601
  %v603 = vperm.slane %v597, %v602
  %v605 = vunpack.c.l.s4 1934713408
  %v606 = vunpack.c.0.s8 %v605
  %v607 = vperm.slane %v599, %v606
  %v608 = vrot.slane %v579, 4
  %v609 = vsel %vm200, %v608, %v567
  %v610 = vrot.slane %v567, 4
  %v611 = vsel %vm200, %v579, %v610
  %v613 = vunpack.c.l.s4 1934713408
  %v614 = vunpack.c.0.s8 %v613
  %v615 = vperm.slane %v609, %v614
  %v617 = vunpack.c.l.s4 1934713408
  %v618 = vunpack.c.0.s8 %v617
  %v619 = vperm.slane %v611, %v618
  %v620 = vrot.slane %v583, 4
  %v621 = vsel %vm200, %v620, %v571
  %v622 = vrot.slane %v571, 4
  %v623 = vsel %vm200, %v583, %v622
  %v625 = vunpack.c.l.s4 1934713408
  %v626 = vunpack.c.0.s8 %v625
  %v627 = vperm.slane %v621, %v626
  %v629 = vunpack.c.l.s4 1934713408
  %v630 = vunpack.c.0.s8 %v629
  %v631 = vperm.slane %v623, %v630
  %v632 = vrot.slane %v615, 4
  %v633 = vsel %vm200, %v632, %v591
  %v634 = vrot.slane %v591, 4
  %v635 = vsel %vm200, %v615, %v634
  %v636 = vrot.slane %v619, 4
  %v637 = vsel %vm200, %v636, %v595
  %v638 = vrot.slane %v595, 4
  %v639 = vsel %vm200, %v619, %v638
  %v640 = vrot.slane %v627, 4
  %v641 = vsel %vm200, %v640, %v603
  %v642 = vrot.slane %v603, 4
  %v643 = vsel %vm200, %v627, %v642
  %v644 = vrot.slane %v631, 4
  %v645 = vsel %vm200, %v644, %v607
  %v646 = vrot.slane %v607, 4
  %v647 = vsel %vm200, %v631, %v646
  %v648 = vrot.slane %v64, 4
  %v649 = vsel %vm200, %v648, %v16
  %v650 = vrot.slane %v16, 4
  %v651 = vsel %vm200, %v64, %v650
  %v653 = vunpack.c.l.s4 1983009808
  %v654 = vunpack.c.0.s8 %v653
  %v655 = vperm.slane %v649, %v654
  %v657 = vunpack.c.l.s4 1983009808
  %v658 = vunpack.c.0.s8 %v657
  %v659 = vperm.slane %v651, %v658
  %v660 = vrot.slane %v88, 4
  %v661 = vsel %vm200, %v660, %v40
  %v662 = vrot.slane %v40, 4
  %v663 = vsel %vm200, %v88, %v662
  %v665 = vunpack.c.l.s4 1983009808
  %v666 = vunpack.c.0.s8 %v665
  %v667 = vperm.slane %v661, %v666
  %v669 = vunpack.c.l.s4 1983009808
  %v670 = vunpack.c.0.s8 %v669
  %v671 = vperm.slane %v663, %v670
  %v672 = vrot.slane %v160, 4
  %v673 = vsel %vm200, %v672, %v112
  %v674 = vrot.slane %v112, 4
  %v675 = vsel %vm200, %v160, %v674
  %v677 = vunpack.c.l.s4 1983009808
  %v678 = vunpack.c.0.s8 %v677
  %v679 = vperm.slane %v673, %v678
  %v681 = vunpack.c.l.s4 1983009808
  %v682 = vunpack.c.0.s8 %v681
  %v683 = vperm.slane %v675, %v682
  %v684 = vrot.slane %v184, 4
  %v685 = vsel %vm200, %v684, %v136
  %v686 = vrot.slane %v136, 4
  %v687 = vsel %vm200, %v184, %v686
  %v689 = vunpack.c.l.s4 1983009808
  %v690 = vunpack.c.0.s8 %v689
  %v691 = vperm.slane %v685, %v690
  %v693 = vunpack.c.l.s4 1983009808
  %v694 = vunpack.c.0.s8 %v693
  %v695 = vperm.slane %v687, %v694
  %v696 = vrot.slane %v667, 4
  %v697 = vsel %vm200, %v696, %v655
  %v698 = vrot.slane %v655, 4
  %v699 = vsel %vm200, %v667, %v698
  %v701 = vunpack.c.l.s4 1934713408
  %v702 = vunpack.c.0.s8 %v701
  %v703 = vperm.slane %v697, %v702
  %v705 = vunpack.c.l.s4 1934713408
  %v706 = vunpack.c.0.s8 %v705
  %v707 = vperm.slane %v699, %v706
  %v708 = vrot.slane %v671, 4
  %v709 = vsel %vm200, %v708, %v659
  %v710 = vrot.slane %v659, 4
  %v711 = vsel %vm200, %v671, %v710
  %v713 = vunpack.c.l.s4 1934713408
  %v714 = vunpack.c.0.s8 %v713
  %v715 = vperm.slane %v709, %v714
  %v717 = vunpack.c.l.s4 1934713408
  %v718 = vunpack.c.0.s8 %v717
  %v719 = vperm.slane %v711, %v718
  %v720 = vrot.slane %v691, 4
  %v721 = vsel %vm200, %v720, %v679
  %v722 = vrot.slane %v679, 4
  %v723 = vsel %vm200, %v691, %v722
  %v725 = vunpack.c.l.s4 1934713408
  %v726 = vunpack.c.0.s8 %v725
  %v727 = vperm.slane %v721, %v726
  %v729 = vunpack.c.l.s4 1934713408
  %v730 = vunpack.c.0.s8 %v729
  %v731 = vperm.slane %v723, %v730
  %v732 = vrot.slane %v695, 4
  %v733 = vsel %vm200, %v732, %v683
  %v734 = vrot.slane %v683, 4
  %v735 = vsel %vm200, %v695, %v734
  %v737 = vunpack.c.l.s4 1934713408
  %v738 = vunpack.c.0.s8 %v737
  %v739 = vperm.slane %v733, %v738
  %v741 = vunpack.c.l.s4 1934713408
  %v742 = vunpack.c.0.s8 %v741
  %v743 = vperm.slane %v735, %v742
  %v744 = vrot.slane %v727, 4
  %v745 = vsel %vm200, %v744, %v703
  %v746 = vrot.slane %v703, 4
  %v747 = vsel %vm200, %v727, %v746
  %v748 = vrot.slane %v731, 4
  %v749 = vsel %vm200, %v748, %v707
  %v750 = vrot.slane %v707, 4
  %v751 = vsel %vm200, %v731, %v750
  %v752 = vrot.slane %v739, 4
  %v753 = vsel %vm200, %v752, %v715
  %v754 = vrot.slane %v715, 4
  %v755 = vsel %vm200, %v739, %v754
  %v756 = vrot.slane %v743, 4
  %v757 = vsel %vm200, %v756, %v719
  %v758 = vrot.slane %v719, 4
  %v759 = vsel %vm200, %v743, %v758
  %v760 = vrot.slane %v66, 4
  %v761 = vsel %vm200, %v760, %v18
  %v762 = vrot.slane %v18, 4
  %v763 = vsel %vm200, %v66, %v762
  %v765 = vunpack.c.l.s4 1983009808
  %v766 = vunpack.c.0.s8 %v765
  %v767 = vperm.slane %v761, %v766
  %v769 = vunpack.c.l.s4 1983009808
  %v770 = vunpack.c.0.s8 %v769
  %v771 = vperm.slane %v763, %v770
  %v772 = vrot.slane %v90, 4
  %v773 = vsel %vm200, %v772, %v42
  %v774 = vrot.slane %v42, 4
  %v775 = vsel %vm200, %v90, %v774
  %v777 = vunpack.c.l.s4 1983009808
  %v778 = vunpack.c.0.s8 %v777
  %v779 = vperm.slane %v773, %v778
  %v781 = vunpack.c.l.s4 1983009808
  %v782 = vunpack.c.0.s8 %v781
  %v783 = vperm.slane %v775, %v782
  %v784 = vrot.slane %v162, 4
  %v785 = vsel %vm200, %v784, %v114
  %v786 = vrot.slane %v114, 4
  %v787 = vsel %vm200, %v162, %v786
  %v789 = vunpack.c.l.s4 1983009808
  %v790 = vunpack.c.0.s8 %v789
  %v791 = vperm.slane %v785, %v790
  %v793 = vunpack.c.l.s4 1983009808
  %v794 = vunpack.c.0.s8 %v793
  %v795 = vperm.slane %v787, %v794
  %v796 = vrot.slane %v186, 4
  %v797 = vsel %vm200, %v796, %v138
  %v798 = vrot.slane %v138, 4
  %v799 = vsel %vm200, %v186, %v798
  %v801 = vunpack.c.l.s4 1983009808
  %v802 = vunpack.c.0.s8 %v801
  %v803 = vperm.slane %v797, %v802
  %v805 = vunpack.c.l.s4 1983009808
  %v806 = vunpack.c.0.s8 %v805
  %v807 = vperm.slane %v799, %v806
  %v808 = vrot.slane %v779, 4
  %v809 = vsel %vm200, %v808, %v767
  %v810 = vrot.slane %v767, 4
  %v811 = vsel %vm200, %v779, %v810
  %v813 = vunpack.c.l.s4 1934713408
  %v814 = vunpack.c.0.s8 %v813
  %v815 = vperm.slane %v809, %v814
  %v817 = vunpack.c.l.s4 1934713408
  %v818 = vunpack.c.0.s8 %v817
  %v819 = vperm.slane %v811, %v818
  %v820 = vrot.slane %v783, 4
  %v821 = vsel %vm200, %v820, %v771
  %v822 = vrot.slane %v771, 4
  %v823 = vsel %vm200, %v783, %v822
  %v825 = vunpack.c.l.s4 1934713408
  %v826 = vunpack.c.0.s8 %v825
  %v827 = vperm.slane %v821, %v826
  %v829 = vunpack.c.l.s4 1934713408
  %v830 = vunpack.c.0.s8 %v829
  %v831 = vperm.slane %v823, %v830
  %v832 = vrot.slane %v803, 4
  %v833 = vsel %vm200, %v832, %v791
  %v834 = vrot.slane %v791, 4
  %v835 = vsel %vm200, %v803, %v834
  %v837 = vunpack.c.l.s4 1934713408
  %v838 = vunpack.c.0.s8 %v837
  %v839 = vperm.slane %v833, %v838
  %v841 = vunpack.c.l.s4 1934713408
  %v842 = vunpack.c.0.s8 %v841
  %v843 = vperm.slane %v835, %v842
  %v844 = vrot.slane %v807, 4
  %v845 = vsel %vm200, %v844, %v795
  %v846 = vrot.slane %v795, 4
  %v847 = vsel %vm200, %v807, %v846
  %v849 = vunpack.c.l.s4 1934713408
  %v850 = vunpack.c.0.s8 %v849
  %v851 = vperm.slane %v845, %v850
  %v853 = vunpack.c.l.s4 1934713408
  %v854 = vunpack.c.0.s8 %v853
  %v855 = vperm.slane %v847, %v854
  %v856 = vrot.slane %v839, 4
  %v857 = vsel %vm200, %v856, %v815
  %v858 = vrot.slane %v815, 4
  %v859 = vsel %vm200, %v839, %v858
  %v860 = vrot.slane %v843, 4
  %v861 = vsel %vm200, %v860, %v819
  %v862 = vrot.slane %v819, 4
  %v863 = vsel %vm200, %v843, %v862
  %v864 = vrot.slane %v851, 4
  %v865 = vsel %vm200, %v864, %v827
  %v866 = vrot.slane %v827, 4
  %v867 = vsel %vm200, %v851, %v866
  %v868 = vrot.slane %v855, 4
  %v869 = vsel %vm200, %v868, %v831
  %v870 = vrot.slane %v831, 4
  %v871 = vsel %vm200, %v855, %v870
  %v872 = vrot.slane %v68, 4
  %v873 = vsel %vm200, %v872, %v20
  %v874 = vrot.slane %v20, 4
  %v875 = vsel %vm200, %v68, %v874
  %v877 = vunpack.c.l.s4 1983009808
  %v878 = vunpack.c.0.s8 %v877
  %v879 = vperm.slane %v873, %v878
  %v881 = vunpack.c.l.s4 1983009808
  %v882 = vunpack.c.0.s8 %v881
  %v883 = vperm.slane %v875, %v882
  %v884 = vrot.slane %v92, 4
  %v885 = vsel %vm200, %v884, %v44
  %v886 = vrot.slane %v44, 4
  %v887 = vsel %vm200, %v92, %v886
  %v889 = vunpack.c.l.s4 1983009808
  %v890 = vunpack.c.0.s8 %v889
  %v891 = vperm.slane %v885, %v890
  %v893 = vunpack.c.l.s4 1983009808
  %v894 = vunpack.c.0.s8 %v893
  %v895 = vperm.slane %v887, %v894
  %v896 = vrot.slane %v164, 4
  %v897 = vsel %vm200, %v896, %v116
  %v898 = vrot.slane %v116, 4
  %v899 = vsel %vm200, %v164, %v898
  %v901 = vunpack.c.l.s4 1983009808
  %v902 = vunpack.c.0.s8 %v901
  %v903 = vperm.slane %v897, %v902
  %v905 = vunpack.c.l.s4 1983009808
  %v906 = vunpack.c.0.s8 %v905
  %v907 = vperm.slane %v899, %v906
  %v908 = vrot.slane %v188, 4
  %v909 = vsel %vm200, %v908, %v140
  %v910 = vrot.slane %v140, 4
  %v911 = vsel %vm200, %v188, %v910
  %v913 = vunpack.c.l.s4 1983009808
  %v914 = vunpack.c.0.s8 %v913
  %v915 = vperm.slane %v909, %v914
  %v917 = vunpack.c.l.s4 1983009808
  %v918 = vunpack.c.0.s8 %v917
  %v919 = vperm.slane %v911, %v918
  %v920 = vrot.slane %v891, 4
  %v921 = vsel %vm200, %v920, %v879
  %v922 = vrot.slane %v879, 4
  %v923 = vsel %vm200, %v891, %v922
  %v925 = vunpack.c.l.s4 1934713408
  %v926 = vunpack.c.0.s8 %v925
  %v927 = vperm.slane %v921, %v926
  %v929 = vunpack.c.l.s4 1934713408
  %v930 = vunpack.c.0.s8 %v929
  %v931 = vperm.slane %v923, %v930
  %v932 = vrot.slane %v895, 4
  %v933 = vsel %vm200, %v932, %v883
  %v934 = vrot.slane %v883, 4
  %v935 = vsel %vm200, %v895, %v934
  %v937 = vunpack.c.l.s4 1934713408
  %v938 = vunpack.c.0.s8 %v937
  %v939 = vperm.slane %v933, %v938
  %v941 = vunpack.c.l.s4 1934713408
  %v942 = vunpack.c.0.s8 %v941
  %v943 = vperm.slane %v935, %v942
  %v944 = vrot.slane %v915, 4
  %v945 = vsel %vm200, %v944, %v903
  %v946 = vrot.slane %v903, 4
  %v947 = vsel %vm200, %v915, %v946
  %v949 = vunpack.c.l.s4 1934713408
  %v950 = vunpack.c.0.s8 %v949
  %v951 = vperm.slane %v945, %v950
  %v953 = vunpack.c.l.s4 1934713408
  %v954 = vunpack.c.0.s8 %v953
  %v955 = vperm.slane %v947, %v954
  %v956 = vrot.slane %v919, 4
  %v957 = vsel %vm200, %v956, %v907
  %v958 = vrot.slane %v907, 4
  %v959 = vsel %vm200, %v919, %v958
  %v961 = vunpack.c.l.s4 1934713408
  %v962 = vunpack.c.0.s8 %v961
  %v963 = vperm.slane %v957, %v962
  %v965 = vunpack.c.l.s4 1934713408
  %v966 = vunpack.c.0.s8 %v965
  %v967 = vperm.slane %v959, %v966
  %v968 = vrot.slane %v951, 4
  %v969 = vsel %vm200, %v968, %v927
  %v970 = vrot.slane %v927, 4
  %v971 = vsel %vm200, %v951, %v970
  %v972 = vrot.slane %v955, 4
  %v973 = vsel %vm200, %v972, %v931
  %v974 = vrot.slane %v931, 4
  %v975 = vsel %vm200, %v955, %v974
  %v976 = vrot.slane %v963, 4
  %v977 = vsel %vm200, %v976, %v939
  %v978 = vrot.slane %v939, 4
  %v979 = vsel %vm200, %v963, %v978
  %v980 = vrot.slane %v967, 4
  %v981 = vsel %vm200, %v980, %v943
  %v982 = vrot.slane %v943, 4
  %v983 = vsel %vm200, %v967, %v982
  %v984 = vrot.slane %v70, 4
  %v985 = vsel %vm200, %v984, %v22
  %v986 = vrot.slane %v22, 4
  %v987 = vsel %vm200, %v70, %v986
  %v989 = vunpack.c.l.s4 1983009808
  %v990 = vunpack.c.0.s8 %v989
  %v991 = vperm.slane %v985, %v990
  %v993 = vunpack.c.l.s4 1983009808
  %v994 = vunpack.c.0.s8 %v993
  %v995 = vperm.slane %v987, %v994
  %v996 = vrot.slane %v94, 4
  %v997 = vsel %vm200, %v996, %v46
  %v998 = vrot.slane %v46, 4
  %v999 = vsel %vm200, %v94, %v998
  %v1001 = vunpack.c.l.s4 1983009808
  %v1002 = vunpack.c.0.s8 %v1001
  %v1003 = vperm.slane %v997, %v1002
  %v1005 = vunpack.c.l.s4 1983009808
  %v1006 = vunpack.c.0.s8 %v1005
  %v1007 = vperm.slane %v999, %v1006
  %v1008 = vrot.slane %v166, 4
  %v1009 = vsel %vm200, %v1008, %v118
  %v1010 = vrot.slane %v118, 4
  %v1011 = vsel %vm200, %v166, %v1010
  %v1013 = vunpack.c.l.s4 1983009808
  %v1014 = vunpack.c.0.s8 %v1013
  %v1015 = vperm.slane %v1009, %v1014
  %v1017 = vunpack.c.l.s4 1983009808
  %v1018 = vunpack.c.0.s8 %v1017
  %v1019 = vperm.slane %v1011, %v1018
  %v1020 = vrot.slane %v190, 4
  %v1021 = vsel %vm200, %v1020, %v142
  %v1022 = vrot.slane %v142, 4
  %v1023 = vsel %vm200, %v190, %v1022
  %v1025 = vunpack.c.l.s4 1983009808
  %v1026 = vunpack.c.0.s8 %v1025
  %v1027 = vperm.slane %v1021, %v1026
  %v1029 = vunpack.c.l.s4 1983009808
  %v1030 = vunpack.c.0.s8 %v1029
  %v1031 = vperm.slane %v1023, %v1030
  %v1032 = vrot.slane %v1003, 4
  %v1033 = vsel %vm200, %v1032, %v991
  %v1034 = vrot.slane %v991, 4
  %v1035 = vsel %vm200, %v1003, %v1034
  %v1037 = vunpack.c.l.s4 1934713408
  %v1038 = vunpack.c.0.s8 %v1037
  %v1039 = vperm.slane %v1033, %v1038
  %v1041 = vunpack.c.l.s4 1934713408
  %v1042 = vunpack.c.0.s8 %v1041
  %v1043 = vperm.slane %v1035, %v1042
  %v1044 = vrot.slane %v1007, 4
  %v1045 = vsel %vm200, %v1044, %v995
  %v1046 = vrot.slane %v995, 4
  %v1047 = vsel %vm200, %v1007, %v1046
  %v1049 = vunpack.c.l.s4 1934713408
  %v1050 = vunpack.c.0.s8 %v1049
  %v1051 = vperm.slane %v1045, %v1050
  %v1053 = vunpack.c.l.s4 1934713408
  %v1054 = vunpack.c.0.s8 %v1053
  %v1055 = vperm.slane %v1047, %v1054
  %v1056 = vrot.slane %v1027, 4
  %v1057 = vsel %vm200, %v1056, %v1015
  %v1058 = vrot.slane %v1015, 4
  %v1059 = vsel %vm200, %v1027, %v1058
  %v1061 = vunpack.c.l.s4 1934713408
  %v1062 = vunpack.c.0.s8 %v1061
  %v1063 = vperm.slane %v1057, %v1062
  %v1065 = vunpack.c.l.s4 1934713408
  %v1066 = vunpack.c.0.s8 %v1065
  %v1067 = vperm.slane %v1059, %v1066
  %v1068 = vrot.slane %v1031, 4
  %v1069 = vsel %vm200, %v1068, %v1019
  %v1070 = vrot.slane %v1019, 4
  %v1071 = vsel %vm200, %v1031, %v1070
  %v1073 = vunpack.c.l.s4 1934713408
  %v1074 = vunpack.c.0.s8 %v1073
  %v1075 = vperm.slane %v1069, %v1074
  %v1077 = vunpack.c.l.s4 1934713408
  %v1078 = vunpack.c.0.s8 %v1077
  %v1079 = vperm.slane %v1071, %v1078
  %v1080 = vrot.slane %v1063, 4
  %v1081 = vsel %vm200, %v1080, %v1039
  %v1082 = vrot.slane %v1039, 4
  %v1083 = vsel %vm200, %v1063, %v1082
  %v1084 = vrot.slane %v1067, 4
  %v1085 = vsel %vm200, %v1084, %v1043
  %v1086 = vrot.slane %v1043, 4
  %v1087 = vsel %vm200, %v1067, %v1086
  %v1088 = vrot.slane %v1075, 4
  %v1089 = vsel %vm200, %v1088, %v1051
  %v1090 = vrot.slane %v1051, 4
  %v1091 = vsel %vm200, %v1075, %v1090
  %v1092 = vrot.slane %v1079, 4
  %v1093 = vsel %vm200, %v1092, %v1055
  %v1094 = vrot.slane %v1055, 4
  %v1095 = vsel %vm200, %v1079, %v1094
  %vm1096 = vcmask 64512
  %1097 = vst.msk [vmem:[%s1] sm:$0xff] %vm1096, 0.0
  %1098 = vst.msk [vmem:[%s1 + $0x8] sm:$0xff] %vm1096, 0.0
  %1099 = vst.msk [vmem:[%s1 + $0x40] sm:$0xff] %vm1096, 0.0
  %1100 = vst.msk [vmem:[%s1 + $0x48] sm:$0xff] %vm1096, 0.0
  %1101 = vst.msk [vmem:[%s1 + $0x30] sm:$0xff] %vm1096, 0.0
  %1102 = vst.msk [vmem:[%s1 + $0x38] sm:$0xff] %vm1096, 0.0
  %1103 = vst.msk [vmem:[%s1 + $0x70] sm:$0xff] %vm1096, 0.0
  %1104 = vst.msk [vmem:[%s1 + $0x78] sm:$0xff] %vm1096, 0.0
  %1169 = vset.pattern.permute.xlu0 0
  %1170 = vperm.xlu0 %1169, %v297
  %v1171 = vpop.permute.xlu0 %1170
  %1172 = vset.pattern.permute.xlu0 0
  %1173 = vperm.xlu0 %1172, %v299
  %v1174 = vpop.permute.xlu0 %1173
  %1175 = vset.pattern.permute.xlu0 0
  %1176 = vperm.xlu0 %1175, %v301
  %v1177 = vpop.permute.xlu0 %1176
  %1178 = vset.pattern.permute.xlu0 0
  %1179 = vperm.xlu0 %1178, %v303
  %v1180 = vpop.permute.xlu0 %1179
  %1181 = vset.pattern.permute.xlu0 0
  %1182 = vperm.xlu0 %1181, %v305
  %v1183 = vpop.permute.xlu0 %1182
  %1184 = vset.pattern.permute.xlu0 0
  %1185 = vperm.xlu0 %1184, %v307
  %v1186 = vpop.permute.xlu0 %1185
  %1187 = vset.pattern.permute.xlu0 0
  %1188 = vperm.xlu0 %1187, %v309
  %v1189 = vpop.permute.xlu0 %1188
  %1190 = vset.pattern.permute.xlu0 0
  %1191 = vperm.xlu0 %1190, %v311
  %v1192 = vpop.permute.xlu0 %1191
  %1193 = vset.pattern.permute.xlu0 0
  %1194 = vperm.xlu0 %1193, %v409
  %v1195 = vpop.permute.xlu0 %1194
  %1196 = vset.pattern.permute.xlu0 0
  %1197 = vperm.xlu0 %1196, %v411
  %v1198 = vpop.permute.xlu0 %1197
  %1199 = vset.pattern.permute.xlu0 0
  %1200 = vperm.xlu0 %1199, %v413
  %v1201 = vpop.permute.xlu0 %1200
  %1202 = vset.pattern.permute.xlu0 0
  %1203 = vperm.xlu0 %1202, %v415
  %v1204 = vpop.permute.xlu0 %1203
  %1205 = vset.pattern.permute.xlu0 0
  %1206 = vperm.xlu0 %1205, %v417
  %v1207 = vpop.permute.xlu0 %1206
  %1208 = vset.pattern.permute.xlu0 0
  %1209 = vperm.xlu0 %1208, %v419
  %v1210 = vpop.permute.xlu0 %1209
  %1211 = vset.pattern.permute.xlu0 0
  %1212 = vperm.xlu0 %1211, %v421
  %v1213 = vpop.permute.xlu0 %1212
  %1214 = vset.pattern.permute.xlu0 0
  %1215 = vperm.xlu0 %1214, %v423
  %v1216 = vpop.permute.xlu0 %1215
  %1217 = vset.pattern.permute.xlu0 0
  %1218 = vperm.xlu0 %1217, %v521
  %v1219 = vpop.permute.xlu0 %1218
  %1220 = vset.pattern.permute.xlu0 0
  %1221 = vperm.xlu0 %1220, %v523
  %v1222 = vpop.permute.xlu0 %1221
  %1223 = vset.pattern.permute.xlu0 0
  %1224 = vperm.xlu0 %1223, %v525
  %v1225 = vpop.permute.xlu0 %1224
  %1226 = vset.pattern.permute.xlu0 0
  %1227 = vperm.xlu0 %1226, %v527
  %v1228 = vpop.permute.xlu0 %1227
  %1229 = vset.pattern.permute.xlu0 0
  %1230 = vperm.xlu0 %1229, %v529
  %v1231 = vpop.permute.xlu0 %1230
  %1232 = vset.pattern.permute.xlu0 0
  %1233 = vperm.xlu0 %1232, %v531
  %v1234 = vpop.permute.xlu0 %1233
  %1235 = vset.pattern.permute.xlu0 0
  %1236 = vperm.xlu0 %1235, %v533
  %v1237 = vpop.permute.xlu0 %1236
  %1238 = vset.pattern.permute.xlu0 0
  %1239 = vperm.xlu0 %1238, %v535
  %v1240 = vpop.permute.xlu0 %1239
  %1241 = vset.pattern.permute.xlu0 0
  %1242 = vperm.xlu0 %1241, %v633
  %v1243 = vpop.permute.xlu0 %1242
  %1244 = vset.pattern.permute.xlu0 0
  %1245 = vperm.xlu0 %1244, %v635
  %v1246 = vpop.permute.xlu0 %1245
  %1247 = vset.pattern.permute.xlu0 0
  %1248 = vperm.xlu0 %1247, %v637
  %v1249 = vpop.permute.xlu0 %1248
  %1250 = vset.pattern.permute.xlu0 0
  %1251 = vperm.xlu0 %1250, %v639
  %v1252 = vpop.permute.xlu0 %1251
  %1253 = vset.pattern.permute.xlu0 0
  %1254 = vperm.xlu0 %1253, %v641
  %v1255 = vpop.permute.xlu0 %1254
  %1256 = vset.pattern.permute.xlu0 0
  %1257 = vperm.xlu0 %1256, %v643
  %v1258 = vpop.permute.xlu0 %1257
  %1259 = vset.pattern.permute.xlu0 0
  %1260 = vperm.xlu0 %1259, %v645
  %v1261 = vpop.permute.xlu0 %1260
  %1262 = vset.pattern.permute.xlu0 0
  %1263 = vperm.xlu0 %1262, %v647
  %v1264 = vpop.permute.xlu0 %1263
  %1265 = vset.pattern.permute.xlu0 0
  %1266 = vperm.xlu0 %1265, %v745
  %v1267 = vpop.permute.xlu0 %1266
  %1268 = vset.pattern.permute.xlu0 0
  %1269 = vperm.xlu0 %1268, %v747
  %v1270 = vpop.permute.xlu0 %1269
  %1271 = vset.pattern.permute.xlu0 0
  %1272 = vperm.xlu0 %1271, %v749
  %v1273 = vpop.permute.xlu0 %1272
  %1274 = vset.pattern.permute.xlu0 0
  %1275 = vperm.xlu0 %1274, %v751
  %v1276 = vpop.permute.xlu0 %1275
  %1277 = vset.pattern.permute.xlu0 0
  %1278 = vperm.xlu0 %1277, %v753
  %v1279 = vpop.permute.xlu0 %1278
  %1280 = vset.pattern.permute.xlu0 0
  %1281 = vperm.xlu0 %1280, %v755
  %v1282 = vpop.permute.xlu0 %1281
  %1283 = vset.pattern.permute.xlu0 0
  %1284 = vperm.xlu0 %1283, %v757
  %v1285 = vpop.permute.xlu0 %1284
  %1286 = vset.pattern.permute.xlu0 0
  %1287 = vperm.xlu0 %1286, %v759
  %v1288 = vpop.permute.xlu0 %1287
  %1289 = vset.pattern.permute.xlu0 0
  %1290 = vperm.xlu0 %1289, %v857
  %v1291 = vpop.permute.xlu0 %1290
  %1292 = vset.pattern.permute.xlu0 0
  %1293 = vperm.xlu0 %1292, %v859
  %v1294 = vpop.permute.xlu0 %1293
  %1295 = vset.pattern.permute.xlu0 0
  %1296 = vperm.xlu0 %1295, %v861
  %v1297 = vpop.permute.xlu0 %1296
  %1298 = vset.pattern.permute.xlu0 0
  %1299 = vperm.xlu0 %1298, %v863
  %v1300 = vpop.permute.xlu0 %1299
  %1301 = vset.pattern.permute.xlu0 0
  %1302 = vperm.xlu0 %1301, %v865
  %v1303 = vpop.permute.xlu0 %1302
  %1304 = vset.pattern.permute.xlu0 0
  %1305 = vperm.xlu0 %1304, %v867
  %v1306 = vpop.permute.xlu0 %1305
  %1307 = vset.pattern.permute.xlu0 0
  %1308 = vperm.xlu0 %1307, %v869
  %v1309 = vpop.permute.xlu0 %1308
  %1310 = vset.pattern.permute.xlu0 0
  %1311 = vperm.xlu0 %1310, %v871
  %v1312 = vpop.permute.xlu0 %1311
  %1313 = vset.pattern.permute.xlu0 0
  %1314 = vperm.xlu0 %1313, %v969
  %v1315 = vpop.permute.xlu0 %1314
  %1316 = vset.pattern.permute.xlu0 0
  %1317 = vperm.xlu0 %1316, %v971
  %v1318 = vpop.permute.xlu0 %1317
  %1319 = vset.pattern.permute.xlu0 0
  %1320 = vperm.xlu0 %1319, %v973
  %v1321 = vpop.permute.xlu0 %1320
  %1322 = vset.pattern.permute.xlu0 0
  %1323 = vperm.xlu0 %1322, %v975
  %v1324 = vpop.permute.xlu0 %1323
  %1325 = vset.pattern.permute.xlu0 0
  %1326 = vperm.xlu0 %1325, %v977
  %v1327 = vpop.permute.xlu0 %1326
  %1328 = vset.pattern.permute.xlu0 0
  %1329 = vperm.xlu0 %1328, %v979
  %v1330 = vpop.permute.xlu0 %1329
  %1331 = vset.pattern.permute.xlu0 0
  %1332 = vperm.xlu0 %1331, %v981
  %v1333 = vpop.permute.xlu0 %1332
  %1334 = vset.pattern.permute.xlu0 0
  %1335 = vperm.xlu0 %1334, %v983
  %v1336 = vpop.permute.xlu0 %1335
  %1337 = vset.pattern.permute.xlu0 0
  %1338 = vperm.xlu0 %1337, %v1081
  %v1339 = vpop.permute.xlu0 %1338
  %1340 = vset.pattern.permute.xlu0 0
  %1341 = vperm.xlu0 %1340, %v1083
  %v1342 = vpop.permute.xlu0 %1341
  %1343 = vset.pattern.permute.xlu0 0
  %1344 = vperm.xlu0 %1343, %v1085
  %v1345 = vpop.permute.xlu0 %1344
  %1346 = vset.pattern.permute.xlu0 0
  %1347 = vperm.xlu0 %1346, %v1087
  %v1348 = vpop.permute.xlu0 %1347
  %1349 = vset.pattern.permute.xlu0 0
  %1350 = vperm.xlu0 %1349, %v1089
  %v1351 = vpop.permute.xlu0 %1350
  %1352 = vset.pattern.permute.xlu0 0
  %1353 = vperm.xlu0 %1352, %v1091
  %v1354 = vpop.permute.xlu0 %1353
  %1355 = vset.pattern.permute.xlu0 0
  %1356 = vperm.xlu0 %1355, %v1093
  %v1357 = vpop.permute.xlu0 %1356
  %1358 = vset.pattern.permute.xlu0 0
  %1359 = vperm.xlu0 %1358, %v1095
  %v1360 = vpop.permute.xlu0 %1359
  %v1361 = vlaneseq
  %v1362 = vand.u32 %v1361, 127
  %v1363 = vperm.slane %v1171, %v1362
  %v1364 = vperm.slane %v1174, %v1362
  %v1365 = vperm.slane %v1177, %v1362
  %v1366 = vperm.slane %v1180, %v1362
  %v1367 = vperm.slane %v1183, %v1362
  %v1368 = vperm.slane %v1186, %v1362
  %v1369 = vperm.slane %v1189, %v1362
  %v1370 = vperm.slane %v1192, %v1362
  %v1371 = vperm.slane %v1195, %v1362
  %v1372 = vperm.slane %v1198, %v1362
  %v1373 = vperm.slane %v1201, %v1362
  %v1374 = vperm.slane %v1204, %v1362
  %v1375 = vperm.slane %v1207, %v1362
  %v1376 = vperm.slane %v1210, %v1362
  %v1377 = vperm.slane %v1213, %v1362
  %v1378 = vperm.slane %v1216, %v1362
  %v1379 = vperm.slane %v1219, %v1362
  %v1380 = vperm.slane %v1222, %v1362
  %v1381 = vperm.slane %v1225, %v1362
  %v1382 = vperm.slane %v1228, %v1362
  %v1383 = vperm.slane %v1231, %v1362
  %v1384 = vperm.slane %v1234, %v1362
  %v1385 = vperm.slane %v1237, %v1362
  %v1386 = vperm.slane %v1240, %v1362
  %v1387 = vperm.slane %v1243, %v1362
  %v1388 = vperm.slane %v1246, %v1362
  %v1389 = vperm.slane %v1249, %v1362
  %v1390 = vperm.slane %v1252, %v1362
  %v1391 = vperm.slane %v1255, %v1362
  %v1392 = vperm.slane %v1258, %v1362
  %v1393 = vperm.slane %v1261, %v1362
  %v1394 = vperm.slane %v1264, %v1362
  %v1395 = vperm.slane %v1267, %v1362
  %v1396 = vperm.slane %v1270, %v1362
  %v1397 = vperm.slane %v1273, %v1362
  %v1398 = vperm.slane %v1276, %v1362
  %v1399 = vperm.slane %v1279, %v1362
  %v1400 = vperm.slane %v1282, %v1362
  %v1401 = vperm.slane %v1285, %v1362
  %v1402 = vperm.slane %v1288, %v1362
  %v1403 = vperm.slane %v1291, %v1362
  %v1404 = vperm.slane %v1294, %v1362
  %v1405 = vperm.slane %v1297, %v1362
  %v1406 = vperm.slane %v1300, %v1362
  %v1407 = vperm.slane %v1303, %v1362
  %v1408 = vperm.slane %v1306, %v1362
  %v1409 = vperm.slane %v1309, %v1362
  %v1410 = vperm.slane %v1312, %v1362
  %v1411 = vperm.slane %v1315, %v1362
  %v1412 = vperm.slane %v1318, %v1362
  %v1413 = vperm.slane %v1321, %v1362
  %v1414 = vperm.slane %v1324, %v1362
  %v1415 = vperm.slane %v1327, %v1362
  %v1416 = vperm.slane %v1330, %v1362
  %v1417 = vperm.slane %v1333, %v1362
  %v1418 = vperm.slane %v1336, %v1362
  %v1419 = vperm.slane %v1339, %v1362
  %v1420 = vperm.slane %v1342, %v1362
  %v1421 = vperm.slane %v1345, %v1362
  %v1422 = vperm.slane %v1348, %v1362
  %v1423 = vperm.slane %v1351, %v1362
  %v1424 = vperm.slane %v1354, %v1362
  %v1425 = vperm.slane %v1357, %v1362
  %v1426 = vperm.slane %v1360, %v1362
  %vm1427 = vcmask 1041409
  %v1428 = vsel %vm1427, %v1364, %v1363
  %vm1429 = vcmask 1042434
  %v1430 = vsel %vm1429, %v1365, %v1428
  %vm1431 = vcmask 1043459
  %v1432 = vsel %vm1431, %v1366, %v1430
  %vm1433 = vcmask 1044484
  %v1434 = vsel %vm1433, %v1367, %v1432
  %vm1435 = vcmask 1045509
  %v1436 = vsel %vm1435, %v1368, %v1434
  %vm1437 = vcmask 1046534
  %v1438 = vsel %vm1437, %v1369, %v1436
  %vm1439 = vcmask 1047559
  %v1440 = vsel %vm1439, %v1370, %v1438
  %v1441 = vsel %vm1427, %v1372, %v1371
  %v1442 = vsel %vm1429, %v1373, %v1441
  %v1443 = vsel %vm1431, %v1374, %v1442
  %v1444 = vsel %vm1433, %v1375, %v1443
  %v1445 = vsel %vm1435, %v1376, %v1444
  %v1446 = vsel %vm1437, %v1377, %v1445
  %v1447 = vsel %vm1439, %v1378, %v1446
  %v1448 = vsel %vm1427, %v1380, %v1379
  %v1449 = vsel %vm1429, %v1381, %v1448
  %v1450 = vsel %vm1431, %v1382, %v1449
  %v1451 = vsel %vm1433, %v1383, %v1450
  %v1452 = vsel %vm1435, %v1384, %v1451
  %v1453 = vsel %vm1437, %v1385, %v1452
  %v1454 = vsel %vm1439, %v1386, %v1453
  %v1455 = vsel %vm1427, %v1388, %v1387
  %v1456 = vsel %vm1429, %v1389, %v1455
  %v1457 = vsel %vm1431, %v1390, %v1456
  %v1458 = vsel %vm1433, %v1391, %v1457
  %v1459 = vsel %vm1435, %v1392, %v1458
  %v1460 = vsel %vm1437, %v1393, %v1459
  %v1461 = vsel %vm1439, %v1394, %v1460
  %v1462 = vsel %vm1427, %v1396, %v1395
  %v1463 = vsel %vm1429, %v1397, %v1462
  %v1464 = vsel %vm1431, %v1398, %v1463
  %v1465 = vsel %vm1433, %v1399, %v1464
  %v1466 = vsel %vm1435, %v1400, %v1465
  %v1467 = vsel %vm1437, %v1401, %v1466
  %v1468 = vsel %vm1439, %v1402, %v1467
  %v1469 = vsel %vm1427, %v1404, %v1403
  %v1470 = vsel %vm1429, %v1405, %v1469
  %v1471 = vsel %vm1431, %v1406, %v1470
  %v1472 = vsel %vm1433, %v1407, %v1471
  %v1473 = vsel %vm1435, %v1408, %v1472
  %v1474 = vsel %vm1437, %v1409, %v1473
  %v1475 = vsel %vm1439, %v1410, %v1474
  %v1476 = vsel %vm1427, %v1412, %v1411
  %v1477 = vsel %vm1429, %v1413, %v1476
  %v1478 = vsel %vm1431, %v1414, %v1477
  %v1479 = vsel %vm1433, %v1415, %v1478
  %v1480 = vsel %vm1435, %v1416, %v1479
  %v1481 = vsel %vm1437, %v1417, %v1480
  %v1482 = vsel %vm1439, %v1418, %v1481
  %v1483 = vsel %vm1427, %v1420, %v1419
  %v1484 = vsel %vm1429, %v1421, %v1483
  %v1485 = vsel %vm1431, %v1422, %v1484
  %v1486 = vsel %vm1433, %v1423, %v1485
  %v1487 = vsel %vm1435, %v1424, %v1486
  %v1488 = vsel %vm1437, %v1425, %v1487
  %v1489 = vsel %vm1439, %v1426, %v1488
  %1498 = vst.msk [vmem:[%s1 + $0x10] sm:$0xff] %vm1096, %v1440
  %1499 = vst.msk [vmem:[%s1 + $0x18] sm:$0xff] %vm1096, %v1447
  %1500 = vst.msk [vmem:[%s1 + $0x20] sm:$0xff] %vm1096, %v1454
  %1501 = vst.msk [vmem:[%s1 + $0x28] sm:$0xff] %vm1096, %v1461
  %1502 = vst.msk [vmem:[%s1 + $0x50] sm:$0xff] %vm1096, %v1468
  %1503 = vst.msk [vmem:[%s1 + $0x58] sm:$0xff] %vm1096, %v1475
  %1504 = vst.msk [vmem:[%s1 + $0x60] sm:$0xff] %vm1096, %v1482
  %1505 = vst.msk [vmem:[%s1 + $0x68] sm:$0xff] %vm1096, %v1489
  // Predicated region
  $region6: #{tpu_custom_call.1} parent=0 // pred_check
    _
  $region7: #{tpu_custom_call.1} parent=0 // pred_check_branch
    %1507 = sbr.rel (0) target = $region9
  $region8: #{tpu_custom_call.1} parent=0 // pred_region
    _
  $region9: #{tpu_custom_call.1} parent=0 // pred_fallthru
    _
  // Predicated region
  $region10: #{tpu_custom_call.1} parent=0 // pred_check
    _
  $region11: #{tpu_custom_call.1} parent=0 // pred_check_branch
    %1509 = sbr.rel (0) target = $region13
  $region12: #{tpu_custom_call.1} parent=0 // pred_region
    _
  $region13: #{tpu_custom_call.1} parent=0 // pred_fallthru
    _

</llo_original>
